<compile_context>
chip_gen: v5e
topology: v5e:2x2
jax: 0.10.0
libtpu: 0.0.40
codegen_flags: <defaults>
</compile_context>

<pallas_src>
import jax
import jax.numpy as jnp
from jax.experimental import pallas as pl
from jax.experimental.pallas import tpu as pltpu

NUM_GROUPS = 32
EPS = 1e-6  # GroupNorm eps used by the usual `Normalize` helper.


def _attention_block_kernel(x_ref, pg_ref, pb_ref, w_ref, b_ref, o_ref, xn_ref):
    # x_ref : (C, N)   native dtype input slab (index constant over the tile
    #                  axis -> fetched once per batch element, also residual)
    # pg_ref: (G, C)   f32  group-average matrix: 1/(gs*N) inside group g
    # pb_ref: (C, G)   f32  one-hot broadcast-back matrix
    # w_ref : (tc, C)  bf16 out_projection rows with GroupNorm gamma folded in
    # b_ref : (tc, 1)  f32  W @ beta + bias
    # o_ref : (tc, N)  native dtype output tile
    # xn_ref: (C, N)   bf16 scratch: normalized activation (MXU RHS)
    j = pl.program_id(1)
    tc = o_ref.shape[0]

    @pl.when(j == 0)
    def _stats_and_normalize():
        # GroupNorm(32, C) statistics, f32 accumulation.  The f32 view of the
        # slab is scoped to this phase only; it is NOT kept live across the
        # matmul / store phase (residual is re-sliced from x_ref below).
        xf = x_ref[...].astype(jnp.float32)                       # (C, N)
        row_sum = jnp.sum(xf, axis=-1, keepdims=True)             # (C, 1)
        row_sq = jnp.sum(xf * xf, axis=-1, keepdims=True)         # (C, 1)
        stats = jnp.concatenate([row_sum, row_sq], axis=-1)       # (C, 2)
        # Two small matmuls: reduce channels->groups, broadcast groups->channels.
        g = jnp.dot(pg_ref[...], stats,
                    preferred_element_type=jnp.float32)           # (G, 2)
        gstats = jnp.dot(pb_ref[...], g,
                         preferred_element_type=jnp.float32)      # (C, 2)
        mean = gstats[:, 0:1]
        var = jnp.maximum(gstats[:, 1:2] - mean * mean, 0.0)      # cancellation guard
        inv = jax.lax.rsqrt(var + EPS)
        # gamma/beta are already folded into W'/b'.
        xn_ref[...] = ((xf - mean) * inv).astype(jnp.bfloat16)

    # --- fused out_projection tile: (tc, C) @ (C, N), bf16 MXU, f32 acc -----
    # (the MultiheadAttention result is discarded in the reference module)
    y = jnp.dot(w_ref[...], xn_ref[...],
                preferred_element_type=jnp.float32)               # (tc, N)

    # Residual: slice the rows of this tile from the resident input slab.
    row0 = pl.multiple_of(j * tc, tc)
    res = x_ref[pl.ds(row0, tc), :].astype(jnp.float32)
    o_ref[...] = (y + b_ref[...] + res).astype(o_ref.dtype)


def _pick_channel_tile(c):
    """Largest convenient output-channel tile (multiple of 8, divides C)."""
    if c <= 256:
        return c
    for cand in (256, 128, 64, 32, 16, 8):
        if c % cand == 0:
            return cand
    return c


def _vmem_budget_bytes():
    """Per-core VMEM cap: ~100 MiB on 128 MiB parts (v5e/v6e), ~56 MiB on v7x."""
    try:
        kind = jax.devices()[0].device_kind.lower()
    except Exception:
        kind = ""
    if "v7" in kind or "7x" in kind:
        return 56 << 20
    return 100 << 20


def attention_block(x_nchw, gamma, beta, w, b, num_groups=NUM_GROUPS):
    """AttentionBlock forward. x_nchw: (B, C, H, W) -> (B, C, H, W)."""
    bsz, c, hgt, wid = x_nchw.shape
    assert c % num_groups == 0, "channels must be divisible by num_groups"
    gs = c // num_groups
    n = hgt * wid
    in_dtype = x_nchw.dtype

    # (B,C,H,W) -> (B,C,N): contiguous merge, no data movement.  The kernel
    # reads x at its native dtype and writes the output dtype directly, so the
    # big streams are one HBM read + one HBM write, nothing more.
    x = x_nchw.reshape(bsz, c, n)

    # Fold the GroupNorm affine into the projection:
    #   W @ (xhat * gamma + beta) + b == (W * gamma) @ xhat + (W @ beta + b)
    gamma_f = gamma.astype(jnp.float32)
    beta_f = beta.astype(jnp.float32)
    w_f32 = w.astype(jnp.float32)
    w_folded = (w_f32 * gamma_f[None, :]).astype(jnp.bfloat16)           # (C, C)
    b_folded = (w_f32 @ beta_f + b.astype(jnp.float32)).reshape(c, 1)    # (C, 1)

    # Group reduce / broadcast matrices ((G,C) and (C,G) instead of dense (C,C)).
    gid = jnp.arange(c) // gs
    grp = jnp.arange(num_groups)
    pool_g = (grp[:, None] == gid[None, :]).astype(jnp.float32) / float(gs * n)
    pool_b = (gid[:, None] == grp[None, :]).astype(jnp.float32)

    tc = _pick_channel_tile(c)
    n_ctiles = c // tc

    # Explicit VMEM budget, including the in-kernel temporaries.
    itemsize = jnp.dtype(in_dtype).itemsize
    est = (2 * c * n * itemsize            # input slab, double-buffered
           + 2 * tc * n * itemsize         # output tile, double-buffered
           + c * n * 2                     # xn bf16 scratch
           + c * n * 4 + tc * n * 4        # f32 stats-phase view + f32 y tile
           + 2 * tc * c * 2                # W' tile
           + 2 * (2 * c * num_groups * 4 + tc * 4))
    vmem_limit = int(min(_vmem_budget_bytes(),
                         max(int(1.3 * est) + (4 << 20), 32 << 20)))

    out = pl.pallas_call(
        _attention_block_kernel,
        out_shape=jax.ShapeDtypeStruct((bsz, c, n), in_dtype),
        grid_spec=pltpu.PrefetchScalarGridSpec(
            num_scalar_prefetch=0,
            grid=(bsz, n_ctiles),
            in_specs=[
                # x: index constant over j -> DMA'd once per batch element.
                pl.BlockSpec((None, c, n), lambda i, j: (i, 0, 0)),
                pl.BlockSpec((num_groups, c), lambda i, j: (0, 0)),   # pool_g f32
                pl.BlockSpec((c, num_groups), lambda i, j: (0, 0)),   # pool_b f32
                pl.BlockSpec((tc, c), lambda i, j: (j, 0)),           # W' bf16
                pl.BlockSpec((tc, 1), lambda i, j: (j, 0)),           # b' f32
            ],
            out_specs=pl.BlockSpec((None, tc, n), lambda i, j: (i, j, 0)),
            scratch_shapes=[pltpu.VMEM((c, n), jnp.bfloat16)],        # xn
        ),
        compiler_params=pltpu.CompilerParams(
            dimension_semantics=("parallel", "arbitrary"),
            vmem_limit_bytes=vmem_limit),
    )(x, pool_g, pool_b, w_folded, b_folded)

    return out.reshape(bsz, c, hgt, wid)


def _reference(x_nchw, gamma, beta, w, b, num_groups=NUM_GROUPS):
    """Pure-JAX f32 reference mirroring the PyTorch forward (incl. dead attention)."""
    bsz, c, hgt, wid = x_nchw.shape
    gs = c // num_groups
    xg = x_nchw.reshape(bsz, num_groups, gs * hgt * wid)
    mean = xg.mean(-1, keepdims=True)
    var = xg.var(-1, keepdims=True)                      # biased, like PyTorch
    xn = ((xg - mean) / jnp.sqrt(var + EPS)).reshape(bsz, c, hgt, wid)
    xn = xn * gamma[None, :, None, None] + beta[None, :, None, None]
    seq = xn.reshape(bsz, c, hgt * wid).transpose(0, 2, 1)   # (B, N, C) == query
    y = jnp.einsum("bnc,dc->bnd", seq, w,
                   precision=jax.lax.Precision.HIGHEST) + b
    y = y.transpose(0, 2, 1).reshape(bsz, c, hgt, wid)
    return y + x_nchw


if __name__ == "__main__":
    B, C, H, W = 2, 64, 16, 16   # C=64 so GroupNorm's 32 groups divide evenly

    key = jax.random.PRNGKey(0)
    kx, kg, kb, kw, kbias = jax.random.split(key, 5)

    x = jax.random.normal(kx, (B, C, H, W), dtype=jnp.float32)
    # GroupNorm affine params (perturbed from ones/zeros so the test is non-trivial).
    gamma = 1.0 + 0.1 * jax.random.normal(kg, (C,), dtype=jnp.float32)
    beta = 0.1 * jax.random.normal(kb, (C,), dtype=jnp.float32)
    # out_projection: nn.Linear(C, C) init ~ U(-1/sqrt(C), 1/sqrt(C)).
    bound = 1.0 / jnp.sqrt(jnp.float32(C))
    w = jax.random.uniform(kw, (C, C), jnp.float32, -bound, bound)
    bias = jax.random.uniform(kbias, (C,), jnp.float32, -bound, bound)

    out = attention_block(x, gamma, beta, w, bias)
    out = jax.block_until_ready(out)

    ref = _reference(x, gamma, beta, w, bias)
    assert out.shape == (B, C, H, W)
    assert out.dtype == x.dtype
    # bf16 MXU operands (W', xn) with f32 accumulation -> relaxed tolerance vs f32 ref.
    assert jnp.allclose(out.astype(jnp.float32), ref, atol=5e-2, rtol=5e-2), (
        f"max abs diff {jnp.max(jnp.abs(out.astype(jnp.float32) - ref))}")

    print("KERNEL_OK")
</pallas_src>

<mosaic_0001>
module attributes {stable_mosaic.version = 11 : i64} {
  func.func @_attention_block_kernel(%arg0: i32, %arg1: i32, %arg2: memref<1x64x256xf32, #tpu.memory_space<vmem>>, %arg3: memref<32x64xf32, #tpu.memory_space<vmem>>, %arg4: memref<64x32xf32, #tpu.memory_space<vmem>>, %arg5: memref<64x64xbf16, #tpu.memory_space<vmem>>, %arg6: memref<64x1xf32, #tpu.memory_space<vmem>>, %arg7: memref<1x64x256xf32, #tpu.memory_space<vmem>>, %arg8: memref<64x256xbf16, #tpu.memory_space<vmem>>) attributes {dimension_semantics = [#tpu.dimension_semantics<parallel>, #tpu.dimension_semantics<arbitrary>], iteration_bounds = array<i64: 2, 1>, scalar_prefetch = 0 : i64, scratch_operands = 1 : i64, tpu.core_type = #tpu.core_type<tc>, window_params = [{transform_indices = @transform_0, window_bounds = array<i64: 1, 64, 256>}, {pipeline_mode = #tpu.pipeline_mode<synchronous>, transform_indices = @transform_1, window_bounds = array<i64: 32, 64>}, {pipeline_mode = #tpu.pipeline_mode<synchronous>, transform_indices = @transform_2, window_bounds = array<i64: 64, 32>}, {transform_indices = @transform_3, window_bounds = array<i64: 64, 64>}, {transform_indices = @transform_4, window_bounds = array<i64: 64, 1>}, {transform_indices = @transform_5, window_bounds = array<i64: 1, 64, 256>}]} {
    %c0_i32 = arith.constant 0 : i32
    %0 = arith.cmpi eq, %arg1, %c0_i32 : i32
    %1 = arith.extui %0 : i1 to i32
    %c0_i32_0 = arith.constant 0 : i32
    %2 = arith.cmpi ne, %1, %c0_i32_0 : i32
    scf.if %2 {
      %c0_11 = arith.constant 0 : index
      %c0_12 = arith.constant 0 : index
      %c0_13 = arith.constant 0 : index
      %18 = vector.load %arg2[%c0_11, %c0_12, %c0_13] : memref<1x64x256xf32, #tpu.memory_space<vmem>>, vector<1x64x256xf32>
      %19 = vector.shape_cast %18 : vector<1x64x256xf32> to vector<64x256xf32>
      %cst_14 = arith.constant dense<0.000000e+00> : vector<64xf32>
      %20 = vector.multi_reduction <add>, %19, %cst_14 [1] : vector<64x256xf32> to vector<64xf32>
      %21 = vector.shape_cast %20 : vector<64xf32> to vector<64x1xf32>
      %22 = arith.mulf %19, %19 : vector<64x256xf32>
      %cst_15 = arith.constant dense<0.000000e+00> : vector<64xf32>
      %23 = vector.multi_reduction <add>, %22, %cst_15 [1] : vector<64x256xf32> to vector<64xf32>
      %24 = vector.shape_cast %23 : vector<64xf32> to vector<64x1xf32>
      %25 = tpu.concatenate %21, %24 in 1 : vector<64x1xf32>, vector<64x1xf32> -> vector<64x2xf32>
      %c0_16 = arith.constant 0 : index
      %c0_17 = arith.constant 0 : index
      %26 = vector.load %arg3[%c0_16, %c0_17] : memref<32x64xf32, #tpu.memory_space<vmem>>, vector<32x64xf32>
      %cst_18 = arith.constant dense<0.000000e+00> : vector<32x2xf32>
      %27 = tpu.matmul %26, %25, %cst_18 {dimension_numbers = #tpu.dot_dimension_numbers<[1], [0], [0], [1], [0, 0, 1, 1], [], []>} : vector<32x64xf32>, vector<64x2xf32>, vector<32x2xf32> -> vector<32x2xf32>
      %c0_19 = arith.constant 0 : index
      %c0_20 = arith.constant 0 : index
      %28 = vector.load %arg4[%c0_19, %c0_20] : memref<64x32xf32, #tpu.memory_space<vmem>>, vector<64x32xf32>
      %cst_21 = arith.constant dense<0.000000e+00> : vector<64x2xf32>
      %29 = tpu.matmul %28, %27, %cst_21 {dimension_numbers = #tpu.dot_dimension_numbers<[1], [0], [0], [1], [0, 0, 1, 1], [], []>} : vector<64x32xf32>, vector<32x2xf32>, vector<64x2xf32> -> vector<64x2xf32>
      %30 = vector.extract_strided_slice %29 {offsets = [0, 0], sizes = [64, 1], strides = [1, 1]} : vector<64x2xf32> to vector<64x1xf32>
      %31 = vector.extract_strided_slice %29 {offsets = [0, 1], sizes = [64, 1], strides = [1, 1]} : vector<64x2xf32> to vector<64x1xf32>
      %32 = arith.mulf %30, %30 : vector<64x1xf32>
      %33 = arith.subf %31, %32 : vector<64x1xf32>
      %cst_22 = arith.constant 0.000000e+00 : f32
      %34 = vector.broadcast %cst_22 : f32 to vector<64x1xf32>
      %35 = arith.maximumf %33, %34 : vector<64x1xf32>
      %cst_23 = arith.constant 9.99999997E-7 : f32
      %36 = vector.broadcast %cst_23 : f32 to vector<64x1xf32>
      %37 = arith.addf %35, %36 : vector<64x1xf32>
      %38 = math.rsqrt %37 : vector<64x1xf32>
      %39 = vector.broadcast %30 : vector<64x1xf32> to vector<64x256xf32>
      %40 = arith.subf %19, %39 : vector<64x256xf32>
      %41 = vector.broadcast %38 : vector<64x1xf32> to vector<64x256xf32>
      %42 = arith.mulf %40, %41 : vector<64x256xf32>
      %43 = arith.truncf %42 : vector<64x256xf32> to vector<64x256xbf16>
      %c0_24 = arith.constant 0 : index
      %c0_25 = arith.constant 0 : index
      %44 = vector.load %arg8[%c0_24, %c0_25] : memref<64x256xbf16, #tpu.memory_space<vmem>>, vector<64x256xbf16>
      tpu.vector_store %arg8[%c0_24, %c0_25], %43 {strides = array<i32>} : memref<64x256xbf16, #tpu.memory_space<vmem>>, vector<64x256xbf16>,
    } else {
    }
    %c0 = arith.constant 0 : index
    %c0_1 = arith.constant 0 : index
    %3 = vector.load %arg5[%c0, %c0_1] : memref<64x64xbf16, #tpu.memory_space<vmem>>, vector<64x64xbf16>
    %c0_2 = arith.constant 0 : index
    %c0_3 = arith.constant 0 : index
    %4 = vector.load %arg8[%c0_2, %c0_3] : memref<64x256xbf16, #tpu.memory_space<vmem>>, vector<64x256xbf16>
    %cst = arith.constant dense<0.000000e+00> : vector<64x256xf32>
    %5 = tpu.matmul %3, %4, %cst {dimension_numbers = #tpu.dot_dimension_numbers<[1], [0], [0], [1], [0, 0, 1, 1], [], []>} : vector<64x64xbf16>, vector<64x256xbf16>, vector<64x256xf32> -> vector<64x256xf32>
    %c64_i32 = arith.constant 64 : i32
    %6 = arith.muli %arg1, %c64_i32 : i32
    %7 = tpu.assume_multiple %6, 64 : i32
    %c0_4 = arith.constant 0 : index
    %8 = arith.index_cast %7 : i32 to index
    %c0_5 = arith.constant 0 : index
    %9 = vector.load %arg2[%c0_4, %8, %c0_5] : memref<1x64x256xf32, #tpu.memory_space<vmem>>, vector<1x64x256xf32>
    %10 = vector.shape_cast %9 : vector<1x64x256xf32> to vector<64x256xf32>
    %c0_6 = arith.constant 0 : index
    %c0_7 = arith.constant 0 : index
    %11 = vector.load %arg6[%c0_6, %c0_7] : memref<64x1xf32, #tpu.memory_space<vmem>>, vector<64x1xf32>
    %12 = vector.broadcast %11 : vector<64x1xf32> to vector<64x256xf32>
    %13 = arith.addf %5, %12 : vector<64x256xf32>
    %14 = arith.addf %13, %10 : vector<64x256xf32>
    %c0_8 = arith.constant 0 : index
    %c0_9 = arith.constant 0 : index
    %c0_10 = arith.constant 0 : index
    %15 = vector.load %arg7[%c0_8, %c0_9, %c0_10] : memref<1x64x256xf32, #tpu.memory_space<vmem>>, vector<1x64x256xf32>
    %16 = vector.shape_cast %15 : vector<1x64x256xf32> to vector<64x256xf32>
    %17 = vector.shape_cast %14 : vector<64x256xf32> to vector<1x64x256xf32>
    tpu.vector_store %arg7[%c0_8, %c0_9, %c0_10], %17 {strides = array<i32>} : memref<1x64x256xf32, #tpu.memory_space<vmem>>, vector<1x64x256xf32>,
    return
  }
  func.func @transform_0(%arg0: i32, %arg1: i32) -> (i32, i32, i32) {
    %c0_i32 = arith.constant 0 : i32
    %c0_i32_0 = arith.constant 0 : i32
    %c0_i32_1 = arith.constant 0 : i32
    return %arg0, %c0_i32, %c0_i32_0 : i32, i32, i32
  }
  func.func @transform_1(%arg0: i32, %arg1: i32) -> (i32, i32) {
    %c0_i32 = arith.constant 0 : i32
    %c0_i32_0 = arith.constant 0 : i32
    %c0_i32_1 = arith.constant 0 : i32
    return %c0_i32, %c0_i32_0 : i32, i32
  }
  func.func @transform_2(%arg0: i32, %arg1: i32) -> (i32, i32) {
    %c0_i32 = arith.constant 0 : i32
    %c0_i32_0 = arith.constant 0 : i32
    %c0_i32_1 = arith.constant 0 : i32
    return %c0_i32, %c0_i32_0 : i32, i32
  }
  func.func @transform_3(%arg0: i32, %arg1: i32) -> (i32, i32) {
    %c0_i32 = arith.constant 0 : i32
    %c0_i32_0 = arith.constant 0 : i32
    return %arg1, %c0_i32 : i32, i32
  }
  func.func @transform_4(%arg0: i32, %arg1: i32) -> (i32, i32) {
    %c0_i32 = arith.constant 0 : i32
    %c0_i32_0 = arith.constant 0 : i32
    return %arg1, %c0_i32 : i32, i32
  }
  func.func @transform_5(%arg0: i32, %arg1: i32) -> (i32, i32, i32) {
    %c0_i32 = arith.constant 0 : i32
    %c0_i32_0 = arith.constant 0 : i32
    return %arg0, %arg1, %c0_i32 : i32, i32, i32
  }
}

</mosaic_0001>

<llo_original>
// kernel: tpu_custom_call.1
$region0: #{tpu_custom_call.1}
  #allocation0 [shape = 'u32[]', space=smem, size = 0x4, offset = 0x4, fixed_abs, tag = 'smem constant byte address 0x4 - core index']
  #allocation1 [shape = 'u32[72,128]{1,0:T(1,128)}', space=vmem, size = 0x9000, scoped, tag = 'internal scratch']
  #allocation2 [shape = 'bf16[64,256]{1,0:T(8,128)(2,1)}', space=vmem, size = 0x8000, scoped, tag = 'scratch operand']
  %s0 = inlined_call_operand.hbm [shape: f32[2,64,256], index: 0, kind: input, shape index: {}]
  %s1 = inlined_call_operand.vmem [shape: f32[32,64], index: 1, kind: input, shape index: {}]
  %s2 = inlined_call_operand.vmem [shape: f32[64,32], index: 2, kind: input, shape index: {}]
  %s3 = inlined_call_operand.vmem [shape: bf16[64,64], index: 3, kind: input, shape index: {}]
  %s4 = inlined_call_operand.vmem [shape: f32[64,1], index: 4, kind: input, shape index: {}]
  %s5 = inlined_call_operand.hbm [shape: f32[2,64,256], index: 5, kind: output, shape index: {}]
  %s6 = sld [smem:[#allocation0]]
  $region61: #{tpu_custom_call.1} parent=0
    _
  %s8 = ssub.s32 1, %s6
  %s9 = scalar_select 0, %s8, %s6
  $region1: #{tpu_custom_call.1} parent=0
    #allocation3 [shape = 'u8[131072]{0}', space=vmem, size = 0x20000, scoped, tag = 'input window, operand 0']
    #allocation4 [shape = 's32[2]{0}', space=sflag, size = 0x8, scoped, tag = 'scoped memory for tpu_custom_call.1']
    #allocation5 [shape = 's32[2]{0}', space=sflag, size = 0x8, scoped, tag = 'scoped memory for tpu_custom_call.1']
    #allocation6 [shape = 'u8[131072]{0}', space=vmem, size = 0x20000, scoped, tag = 'output window, operand 0']
    %10 = vsyncpa [#allocation4], 0
    %s11 = scalar_lea.sflag [#allocation4], 1
    %12 = vsyncpa %s11, 0
    %13 = vsyncpa [#allocation5], 0
    %s14 = scalar_lea.sflag [#allocation5], 1
    %15 = vsyncpa %s14, 0
    loop: start=0, step=1, limit=4
    $region2: #{tpu_custom_call.1} parent=1 // loop_pre_header
      _
    $region3: #{tpu_custom_call.1} parent=1 // loop_header
      %s17 = sphi 0, %s21
      %p18 = scmp.ge.s32.totalorder %s17, 4
      %s24 = sphi 0, %s36
      %s25 = sphi 0, %s32
      %s26 = sphi 0, %s24
      %s27 = sphi 0, %s25
      %s28 = sphi 0, %s26
      %s29 = sphi 0, %s27
      %s39 = sphi 0, %s41
      %s42 = sphi 0, %s39
      %s43 = sphi 0, %s42
      %s59 = sphi 0, %s43
      %s63 = sphi 0, %s63
      %s65 = sphi 0, %s63
      %s66 = sphi 0, %s65
      %s80 = sphi 0, %s66
      %s84 = sphi 0, %s84
      %s86 = sphi 0, %s84
      %s87 = sphi 0, %s86
      %s101 = sphi 0, %s87
      %s107 = sphi 0, %s109
      %s110 = sphi 0, %s107
      %s111 = sphi 0, %s110
      %s127 = sphi 0, %s111
      %s133 = sphi 0, %s135
      %s136 = sphi 0, %s133
      %s137 = sphi 0, %s136
      %s153 = sphi 0, %s137
      %s161 = sphi 0, %s163
      %s164 = sphi 0, %s161
      %s165 = sphi 0, %s164
      %s181 = sphi 0, %s165
    $region4: #{tpu_custom_call.1} parent=1 // loop_header_branch
      %20 = sbr.rel (%p18) target = $region8
    $region5: #{tpu_custom_call.1} parent=1 // loop_body
      %s22 = ssub.s32 %s17, 1
      %s23 = ssub.s32 %s17, 2
      %s30 = sadd.s32 1, %s25
      %p31 = scmp.ge.s32.totalorder %s30, 1
      %s32 = scalar_select %p31, 0, %s30
      %s33 = sadd.s32 1, %s24
      %s34 = scalar_select %p31, %s33, %s24
      %p35 = scmp.ge.s32.totalorder %s34, 2
      %s36 = scalar_select %p35, 0, %s34
      %s37 = ssub.s32 %s24, %s36
      %p38 = scmp.eq.s32.totalorder %s37, 0
      %s40 = sadd.s32 %s39, 1
      %s41 = scalar_select %p38, %s39, %s40
      %p44 = pneg %p38
      %p45 = scmp.eq.s32.totalorder %s17, 1
      %p46 = por %p44, %p45
      %p47 = scmp.ne.s32.totalorder %s39, %s42
      %p48 = scmp.eq.s32.totalorder %s17, 0
      %p49 = por %p47, %p48
      %p50 = scmp.ne.s32.totalorder %s39, %s42
      %p51 = scmp.eq.s32.totalorder %s22, 1
      %p52 = por %p50, %p51
      %p53 = scmp.ne.s32.totalorder %s42, %s43
      %p54 = scmp.eq.s32.totalorder %s22, 0
      %p55 = por %p53, %p54
      %p56 = scmp.ne.s32.totalorder %s42, %s43
      %p57 = scmp.eq.s32.totalorder %s23, 1
      %p58 = por %p56, %p57
      %p60 = scmp.ne.s32.totalorder %s43, %s59
      %p61 = scmp.eq.s32.totalorder %s23, 0
      %p62 = por %p60, %p61
      %s64 = sadd.s32 %s63, 1
      %p67 = scmp.eq.s32.totalorder %s17, 1
      %p68 = scmp.ne.s32.totalorder %s63, %s65
      %p69 = scmp.eq.s32.totalorder %s17, 0
      %p70 = por %p68, %p69
      %p71 = scmp.ne.s32.totalorder %s63, %s65
      %p72 = scmp.eq.s32.totalorder %s22, 1
      %p73 = por %p71, %p72
      %p74 = scmp.ne.s32.totalorder %s65, %s66
      %p75 = scmp.eq.s32.totalorder %s22, 0
      %p76 = por %p74, %p75
      %p77 = scmp.ne.s32.totalorder %s65, %s66
      %p78 = scmp.eq.s32.totalorder %s23, 1
      %p79 = por %p77, %p78
      %p81 = scmp.ne.s32.totalorder %s66, %s80
      %p82 = scmp.eq.s32.totalorder %s23, 0
      %p83 = por %p81, %p82
      %s85 = sadd.s32 %s84, 1
      %p88 = scmp.eq.s32.totalorder %s17, 1
      %p89 = scmp.ne.s32.totalorder %s84, %s86
      %p90 = scmp.eq.s32.totalorder %s17, 0
      %p91 = por %p89, %p90
      %p92 = scmp.ne.s32.totalorder %s84, %s86
      %p93 = scmp.eq.s32.totalorder %s22, 1
      %p94 = por %p92, %p93
      %p95 = scmp.ne.s32.totalorder %s86, %s87
      %p96 = scmp.eq.s32.totalorder %s22, 0
      %p97 = por %p95, %p96
      %p98 = scmp.ne.s32.totalorder %s86, %s87
      %p99 = scmp.eq.s32.totalorder %s23, 1
      %p100 = por %p98, %p99
      %p102 = scmp.ne.s32.totalorder %s87, %s101
      %p103 = scmp.eq.s32.totalorder %s23, 0
      %p104 = por %p102, %p103
      %s105 = ssub.s32 %s25, %s32
      %p106 = scmp.eq.s32.totalorder %s105, 0
      %s108 = sadd.s32 %s107, 1
      %s109 = scalar_select %p106, %s107, %s108
      %p112 = pneg %p106
      %p113 = scmp.eq.s32.totalorder %s17, 1
      %p114 = por %p112, %p113
      %p115 = scmp.ne.s32.totalorder %s107, %s110
      %p116 = scmp.eq.s32.totalorder %s17, 0
      %p117 = por %p115, %p116
      %p118 = scmp.ne.s32.totalorder %s107, %s110
      %p119 = scmp.eq.s32.totalorder %s22, 1
      %p120 = por %p118, %p119
      %p121 = scmp.ne.s32.totalorder %s110, %s111
      %p122 = scmp.eq.s32.totalorder %s22, 0
      %p123 = por %p121, %p122
      %p124 = scmp.ne.s32.totalorder %s110, %s111
      %p125 = scmp.eq.s32.totalorder %s23, 1
      %p126 = por %p124, %p125
      %p128 = scmp.ne.s32.totalorder %s111, %s127
      %p129 = scmp.eq.s32.totalorder %s23, 0
      %p130 = por %p128, %p129
      %s131 = ssub.s32 %s25, %s32
      %p132 = scmp.eq.s32.totalorder %s131, 0
      %s134 = sadd.s32 %s133, 1
      %s135 = scalar_select %p132, %s133, %s134
      %p138 = pneg %p132
      %p139 = scmp.eq.s32.totalorder %s17, 1
      %p140 = por %p138, %p139
      %p141 = scmp.ne.s32.totalorder %s133, %s136
      %p142 = scmp.eq.s32.totalorder %s17, 0
      %p143 = por %p141, %p142
      %p144 = scmp.ne.s32.totalorder %s133, %s136
      %p145 = scmp.eq.s32.totalorder %s22, 1
      %p146 = por %p144, %p145
      %p147 = scmp.ne.s32.totalorder %s136, %s137
      %p148 = scmp.eq.s32.totalorder %s22, 0
      %p149 = por %p147, %p148
      %p150 = scmp.ne.s32.totalorder %s136, %s137
      %p151 = scmp.eq.s32.totalorder %s23, 1
      %p152 = por %p150, %p151
      %p154 = scmp.ne.s32.totalorder %s137, %s153
      %p155 = scmp.eq.s32.totalorder %s23, 0
      %p156 = por %p154, %p155
      %s157 = ssub.s32 %s24, %s36
      %s158 = ssub.s32 %s25, %s32
      %s159 = sor.u32 %s157, %s158
      %p160 = scmp.eq.s32.totalorder %s159, 0
      %s162 = sadd.s32 %s161, 1
      %s163 = scalar_select %p160, %s161, %s162
      %p166 = pneg %p160
      %p167 = scmp.eq.s32.totalorder %s17, 1
      %p168 = por %p166, %p167
      %p169 = scmp.ne.s32.totalorder %s161, %s164
      %p170 = scmp.eq.s32.totalorder %s17, 0
      %p171 = por %p169, %p170
      %p172 = scmp.ne.s32.totalorder %s161, %s164
      %p173 = scmp.eq.s32.totalorder %s22, 1
      %p174 = por %p172, %p173
      %p175 = scmp.ne.s32.totalorder %s164, %s165
      %p176 = scmp.eq.s32.totalorder %s22, 0
      %p177 = por %p175, %p176
      %p178 = scmp.ne.s32.totalorder %s164, %s165
      %p179 = scmp.eq.s32.totalorder %s23, 1
      %p180 = por %p178, %p179
      %p182 = scmp.ne.s32.totalorder %s165, %s181
      %p183 = scmp.eq.s32.totalorder %s23, 0
      %p184 = por %p182, %p183
      %p185 = scmp.le.s32.totalorder 1, %s17
      %p186 = scmp.lt.s32.totalorder %s17, 3
      %p187 = pnand %p185, %p186
      %p188 = pneg %p187
      // Predicated region
      $region9: #{tpu_custom_call.1} parent=5 // pred_check
        _
      $region10: #{tpu_custom_call.1} parent=5 // pred_check_branch
        %190 = sbr.rel (%p187) target = $region12
      $region11: #{tpu_custom_call.1} parent=5 // pred_region
        %s191 = ssub.s32 %s17, 1
        // Predicated region
        $region13: #{tpu_custom_call.1} parent=11 // pred_check
          %p192 = pneg %p76
        $region14: #{tpu_custom_call.1} parent=11 // pred_check_branch
          %194 = sbr.rel (%p192) target = $region16
        $region15: #{tpu_custom_call.1} parent=11 // pred_region
          _
        $region16: #{tpu_custom_call.1} parent=11 // pred_fallthru
          _
        // Predicated region
        $region17: #{tpu_custom_call.1} parent=11 // pred_check
          %p195 = pneg %p97
        $region18: #{tpu_custom_call.1} parent=11 // pred_check_branch
          %197 = sbr.rel (%p195) target = $region20
        $region19: #{tpu_custom_call.1} parent=11 // pred_region
          _
        $region20: #{tpu_custom_call.1} parent=11 // pred_fallthru
          _
        // Predicated region
        $region21: #{tpu_custom_call.1} parent=11 // pred_check
          %p198 = pneg %p123
        $region22: #{tpu_custom_call.1} parent=11 // pred_check_branch
          %200 = sbr.rel (%p198) target = $region24
        $region23: #{tpu_custom_call.1} parent=11 // pred_region
          %s201 = smul.u32 8, %s27
          %p202 = scmp.lt.s32.totalorder %s201, 7
          %s203 = scalar_select %p202, %s201, 7
          %s204 = smul.addr %s203, 4
          %s205 = scalar_lea.vmem %s3, %s204
          %s206 = smul.u32 8, %s27
        $region24: #{tpu_custom_call.1} parent=11 // pred_fallthru
          _
        // Predicated region
        $region25: #{tpu_custom_call.1} parent=11 // pred_check
          %p207 = pneg %p149
        $region26: #{tpu_custom_call.1} parent=11 // pred_check_branch
          %209 = sbr.rel (%p207) target = $region28
        $region27: #{tpu_custom_call.1} parent=11 // pred_region
          %s210 = smul.u32 8, %s27
          %p211 = scmp.lt.s32.totalorder %s210, 7
          %s212 = scalar_select %p211, %s210, 7
          %s213 = smul.addr %s212, 8
          %s214 = scalar_lea.vmem %s4, %s213
          %s215 = smul.u32 8, %s27
        $region28: #{tpu_custom_call.1} parent=11 // pred_fallthru
          _
      $region12: #{tpu_custom_call.1} parent=5 // pred_fallthru
        _
      %p216 = scmp.lt.s32.totalorder %s17, 2
      // Predicated region
      $region29: #{tpu_custom_call.1} parent=5 // pred_check
        %p217 = pneg %p216
      $region30: #{tpu_custom_call.1} parent=5 // pred_check_branch
        %219 = sbr.rel (%p217) target = $region32
      $region31: #{tpu_custom_call.1} parent=5 // pred_region
        // Predicated region
        $region33: #{tpu_custom_call.1} parent=31 // pred_check
          %p220 = pneg %p49
        $region34: #{tpu_custom_call.1} parent=31 // pred_check_branch
          %222 = sbr.rel (%p220) target = $region36
        $region35: #{tpu_custom_call.1} parent=31 // pred_region
          %s223 = sand.u32 %s39, 1
          %s224 = scalar_lea.sflag [#allocation4], %s223
          %s225 = sand.u32 %s39, 1
          %s226 = smul.addr %s225, 128
          %s227 = scalar_lea.vmem [#allocation3], %s226
          %229 = vsyncadd %s224, 0
          %s230 = smul.addr %s24, 16
          %s231 = smul.addr %s230, 8
          %s232 = scalar_lea.hbm %s0, %s231
          %s233 = sshll.u32 %s232, 4
          %s234 = int_to_ptr.hbm [resolvable:$true] %s233
          %s235 = sshll.u32 %s227, 4
          %s236 = int_to_ptr.vmem [resolvable:$true] %s235
          %241 = dma.hbm_to_vmem [thread:$0]  %s234, 2048, %s236, %s224, 256, 256, 16
        $region36: #{tpu_custom_call.1} parent=31 // pred_fallthru
          _
      $region32: #{tpu_custom_call.1} parent=5 // pred_fallthru
        _
      %p242 = scmp.le.s32.totalorder 1, %s17
      %p243 = scmp.lt.s32.totalorder %s17, 3
      %p244 = pnand %p242, %p243
      %p245 = pneg %p244
      // Predicated region
      $region37: #{tpu_custom_call.1} parent=5 // pred_check
        _
      $region38: #{tpu_custom_call.1} parent=5 // pred_check_branch
        %247 = sbr.rel (%p244) target = $region40
      $region39: #{tpu_custom_call.1} parent=5 // pred_region
        %s248 = ssub.s32 %s17, 1
        %s249 = sand.u32 %s42, 1
        %s250 = scalar_lea.sflag [#allocation4], %s249
        %s251 = sand.u32 %s42, 1
        %s252 = smul.addr %s251, 128
        %s253 = scalar_lea.vmem [#allocation3], %s252
        // Predicated region
        $region41: #{tpu_custom_call.1} parent=39 // pred_check
          %p254 = pneg %p55
        $region42: #{tpu_custom_call.1} parent=39 // pred_check_branch
          %256 = sbr.rel (%p254) target = $region44
        $region43: #{tpu_custom_call.1} parent=39 // pred_region
          %258 = dma.done %s250, 2048
        $region44: #{tpu_custom_call.1} parent=39 // pred_fallthru
          _
        %s259 = sand.u32 %s42, 1
        %s260 = scalar_lea.sflag [#allocation4], %s259
        %s261 = sand.u32 %s42, 1
        %s262 = smul.addr %s261, 128
        %s263 = scalar_lea.vmem [#allocation3], %s262
        %p264 = pneg %p55
        %p265 = pneg %p52
        %p266 = pneg %p76
        %p267 = pneg %p73
        %p268 = pneg %p97
        %p269 = pneg %p94
        %s270 = smul.u32 8, %s27
        %p271 = scmp.lt.s32.totalorder %s270, 7
        %s272 = scalar_select %p271, %s270, 7
        %s273 = smul.addr %s272, 4
        %s274 = scalar_lea.vmem %s3, %s273
        %p275 = pneg %p123
        %p276 = pneg %p120
        %s277 = smul.u32 8, %s27
        %p278 = scmp.lt.s32.totalorder %s277, 7
        %s279 = scalar_select %p278, %s277, 7
        %s280 = smul.addr %s279, 8
        %s281 = scalar_lea.vmem %s4, %s280
        %p282 = pneg %p149
        %p283 = pneg %p146
        %p284 = pneg %p177
        %p285 = pneg %p174
        %s286 = sand.u32 %s164, 1
        %s287 = scalar_lea.sflag [#allocation5], %s286
        %s288 = sand.u32 %s164, 1
        %s289 = smul.addr %s288, 128
        %s290 = scalar_lea.vmem [#allocation6], %s289
        %s291 = smul.u32 8, %s27
        %p292 = scmp.lt.s32.totalorder %s291, 7
        %s293 = scalar_select %p292, %s291, 7
        %s294 = smul.addr %s293, 4
        %s295 = scalar_lea.vmem %s3, %s294
        %s296 = smul.u32 8, %s27
        %s297 = smul.u32 8, %s27
        %p298 = scmp.lt.s32.totalorder %s297, 7
        %s299 = scalar_select %p298, %s297, 7
        %s300 = smul.addr %s299, 8
        %s301 = scalar_lea.vmem %s4, %s300
        %s302 = smul.u32 8, %s27
        %s303 = smul.u32 8, %s27
        %p305 = scmp.eq.s32.totalorder %s27, 0
        // Predicated region
        $region45: #{tpu_custom_call.1} parent=39 // pred_check
          %p306 = pneg %p305
        $region46: #{tpu_custom_call.1} parent=39 // pred_check_branch
          %308 = sbr.rel (%p306) target = $region48
        $region47: #{tpu_custom_call.1} parent=39 // pred_region
          %v309 = vld [vmem:[%s253] sm:$0xff]
          %v310 = vld [vmem:[%s253 + $0x8] sm:$0xff]
          %v311 = vld [vmem:[%s253 + $0x10] sm:$0xff]
          %v312 = vld [vmem:[%s253 + $0x18] sm:$0xff]
          %v313 = vld [vmem:[%s253 + $0x20] sm:$0xff]
          %v314 = vld [vmem:[%s253 + $0x28] sm:$0xff]
          %v315 = vld [vmem:[%s253 + $0x30] sm:$0xff]
          %v316 = vld [vmem:[%s253 + $0x38] sm:$0xff]
          %v317 = vld [vmem:[%s253 + $0x40] sm:$0xff]
          %v318 = vld [vmem:[%s253 + $0x48] sm:$0xff]
          %v319 = vld [vmem:[%s253 + $0x50] sm:$0xff]
          %v320 = vld [vmem:[%s253 + $0x58] sm:$0xff]
          %v321 = vld [vmem:[%s253 + $0x60] sm:$0xff]
          %v322 = vld [vmem:[%s253 + $0x68] sm:$0xff]
          %v323 = vld [vmem:[%s253 + $0x70] sm:$0xff]
          %v324 = vld [vmem:[%s253 + $0x78] sm:$0xff]
          %v325 = vadd.f32 %v309, %v310
          %326 = vadd.xlane.f32.xlu0 %v325
          %v327 = vpop.xlane.xlu0 %326
          %v328 = vadd.f32 %v311, %v312
          %329 = vadd.xlane.f32.xlu0 %v328
          %v330 = vpop.xlane.xlu0 %329
          %v331 = vadd.f32 %v313, %v314
          %332 = vadd.xlane.f32.xlu0 %v331
          %v333 = vpop.xlane.xlu0 %332
          %v334 = vadd.f32 %v315, %v316
          %335 = vadd.xlane.f32.xlu0 %v334
          %v336 = vpop.xlane.xlu0 %335
          %v337 = vadd.f32 %v317, %v318
          %338 = vadd.xlane.f32.xlu0 %v337
          %v339 = vpop.xlane.xlu0 %338
          %v340 = vadd.f32 %v319, %v320
          %341 = vadd.xlane.f32.xlu0 %v340
          %v342 = vpop.xlane.xlu0 %341
          %v343 = vadd.f32 %v321, %v322
          %344 = vadd.xlane.f32.xlu0 %v343
          %v345 = vpop.xlane.xlu0 %344
          %v346 = vadd.f32 %v323, %v324
          %347 = vadd.xlane.f32.xlu0 %v346
          %v348 = vpop.xlane.xlu0 %347
          %v349 = vmul.f32 %v309, %v309
          %v350 = vmul.f32 %v310, %v310
          %v351 = vmul.f32 %v311, %v311
          %v352 = vmul.f32 %v312, %v312
          %v353 = vmul.f32 %v313, %v313
          %v354 = vmul.f32 %v314, %v314
          %v355 = vmul.f32 %v315, %v315
          %v356 = vmul.f32 %v316, %v316
          %v357 = vmul.f32 %v317, %v317
          %v358 = vmul.f32 %v318, %v318
          %v359 = vmul.f32 %v319, %v319
          %v360 = vmul.f32 %v320, %v320
          %v361 = vmul.f32 %v321, %v321
          %v362 = vmul.f32 %v322, %v322
          %v363 = vmul.f32 %v323, %v323
          %v364 = vmul.f32 %v324, %v324
          %v365 = vadd.f32 %v349, %v350
          %366 = vadd.xlane.f32.xlu0 %v365
          %v367 = vpop.xlane.xlu0 %366
          %v368 = vadd.f32 %v351, %v352
          %369 = vadd.xlane.f32.xlu0 %v368
          %v370 = vpop.xlane.xlu0 %369
          %v371 = vadd.f32 %v353, %v354
          %372 = vadd.xlane.f32.xlu0 %v371
          %v373 = vpop.xlane.xlu0 %372
          %v374 = vadd.f32 %v355, %v356
          %375 = vadd.xlane.f32.xlu0 %v374
          %v376 = vpop.xlane.xlu0 %375
          %v377 = vadd.f32 %v357, %v358
          %378 = vadd.xlane.f32.xlu0 %v377
          %v379 = vpop.xlane.xlu0 %378
          %v380 = vadd.f32 %v359, %v360
          %381 = vadd.xlane.f32.xlu0 %v380
          %v382 = vpop.xlane.xlu0 %381
          %v383 = vadd.f32 %v361, %v362
          %384 = vadd.xlane.f32.xlu0 %v383
          %v385 = vpop.xlane.xlu0 %384
          %v386 = vadd.f32 %v363, %v364
          %387 = vadd.xlane.f32.xlu0 %v386
          %v388 = vpop.xlane.xlu0 %387
          %vm389 = vcmask 7168
          %v390 = vsel %vm389, %v327, %v367
          %v391 = vsel %vm389, %v330, %v370
          %v392 = vsel %vm389, %v333, %v373
          %v393 = vsel %vm389, %v336, %v376
          %v394 = vsel %vm389, %v339, %v379
          %v395 = vsel %vm389, %v342, %v382
          %v396 = vsel %vm389, %v345, %v385
          %v397 = vsel %vm389, %v348, %v388
          %v398 = vld [vmem:[%s1] sm:$0xff]
          %v399 = vld [vmem:[%s1 + $0x8] sm:$0xff]
          %v400 = vld [vmem:[%s1 + $0x10] sm:$0xff]
          %v401 = vld [vmem:[%s1 + $0x18] sm:$0xff]
          %vm402 = vcmask 523264
          %v404 = vsel %vm402, %v398, 0
          %v407 = vsel %vm402, %v399, 0
          %v410 = vsel %vm402, %v400, 0
          %v413 = vsel %vm402, %v401, 0
          %415 = vmatpush.msra.mxu0 0.0
          %416 = vmatpush.msra.mxu0 0.0
          %417 = vmatpush.msra.mxu0 0.0
          %418 = vmatpush.msra.mxu0 0.0
          %419 = vmatpush.msra.mxu0 0.0
          %420 = vmatpush.msra.mxu0 0.0
          %421 = vmatpush.msra.mxu0 0.0
          %422 = vmatpush.msra.mxu0 0.0
          %423 = vmatpush.msra.mxu0 %v397
          %424 = vmatpush.msra.mxu0 %v396
          %425 = vmatpush.msra.mxu0 %v395
          %426 = vmatpush.msra.mxu0 %v394
          %427 = vmatpush.msra.mxu0 %v393
          %428 = vmatpush.msra.mxu0 %v392
          %429 = vmatpush.msra.mxu0 %v391
          %430 = vmatpush.msra.mxu0 %v390
          %431 = vmatmul.f32.gmra.mxu0 %v404
          %v432 = vpop.f32.mrf.mxu0
          %v433 = vadd.f32 0.0, %v432
          %434 = vmatmul.f32.gmra.mxu0 %v407
          %v435 = vpop.f32.mrf.mxu0
          %v436 = vadd.f32 0.0, %v435
          %437 = vmatmul.f32.gmra.mxu0 %v410
          %v438 = vpop.f32.mrf.mxu0
          %v439 = vadd.f32 0.0, %v438
          %440 = vmatmul.f32.gmra.mxu0 %v413
          %v441 = vpop.f32.mrf.mxu0
          %v442 = vadd.f32 0.0, %v441
          %443 = vdwg.mxu0
          %v444 = vld [vmem:[%s2] sm:$0xff]
          %v445 = vld [vmem:[%s2 + $0x8] sm:$0xff]
          %v446 = vld [vmem:[%s2 + $0x10] sm:$0xff]
          %v447 = vld [vmem:[%s2 + $0x18] sm:$0xff]
          %v448 = vld [vmem:[%s2 + $0x20] sm:$0xff]
          %v449 = vld [vmem:[%s2 + $0x28] sm:$0xff]
          %v450 = vld [vmem:[%s2 + $0x30] sm:$0xff]
          %v451 = vld [vmem:[%s2 + $0x38] sm:$0xff]
          %vm452 = vcmask 261120
          %v454 = vsel %vm452, %v444, 0
          %v457 = vsel %vm452, %v445, 0
          %v460 = vsel %vm452, %v446, 0
          %v463 = vsel %vm452, %v447, 0
          %v466 = vsel %vm452, %v448, 0
          %v469 = vsel %vm452, %v449, 0
          %v472 = vsel %vm452, %v450, 0
          %v475 = vsel %vm452, %v451, 0
          %477 = vmatpush.msra.mxu0 0.0
          %478 = vmatpush.msra.mxu0 0.0
          %479 = vmatpush.msra.mxu0 0.0
          %480 = vmatpush.msra.mxu0 0.0
          %481 = vmatpush.msra.mxu0 0.0
          %482 = vmatpush.msra.mxu0 0.0
          %483 = vmatpush.msra.mxu0 0.0
          %484 = vmatpush.msra.mxu0 0.0
          %485 = vmatpush.msra.mxu0 0.0
          %486 = vmatpush.msra.mxu0 0.0
          %487 = vmatpush.msra.mxu0 0.0
          %488 = vmatpush.msra.mxu0 0.0
          %489 = vmatpush.msra.mxu0 %v442
          %490 = vmatpush.msra.mxu0 %v439
          %491 = vmatpush.msra.mxu0 %v436
          %492 = vmatpush.msra.mxu0 %v433
          %493 = vmatmul.f32.gmra.mxu0 %v454
          %v494 = vpop.f32.mrf.mxu0
          %v495 = vadd.f32 0.0, %v494
          %496 = vmatmul.f32.gmra.mxu0 %v457
          %v497 = vpop.f32.mrf.mxu0
          %v498 = vadd.f32 0.0, %v497
          %499 = vmatmul.f32.gmra.mxu0 %v460
          %v500 = vpop.f32.mrf.mxu0
          %v501 = vadd.f32 0.0, %v500
          %502 = vmatmul.f32.gmra.mxu0 %v463
          %v503 = vpop.f32.mrf.mxu0
          %v504 = vadd.f32 0.0, %v503
          %505 = vmatmul.f32.gmra.mxu0 %v466
          %v506 = vpop.f32.mrf.mxu0
          %v507 = vadd.f32 0.0, %v506
          %508 = vmatmul.f32.gmra.mxu0 %v469
          %v509 = vpop.f32.mrf.mxu0
          %v510 = vadd.f32 0.0, %v509
          %511 = vmatmul.f32.gmra.mxu0 %v472
          %v512 = vpop.f32.mrf.mxu0
          %v513 = vadd.f32 0.0, %v512
          %514 = vmatmul.f32.gmra.mxu0 %v475
          %v515 = vpop.f32.mrf.mxu0
          %v516 = vadd.f32 0.0, %v515
          %517 = vdwg.mxu0
          %v518 = vmul.f32 %v495, %v495
          %v519 = vmul.f32 %v498, %v498
          %v520 = vmul.f32 %v501, %v501
          %v521 = vmul.f32 %v504, %v504
          %v522 = vmul.f32 %v507, %v507
          %v523 = vmul.f32 %v510, %v510
          %v524 = vmul.f32 %v513, %v513
          %v525 = vmul.f32 %v516, %v516
          %534 = vrot.lane.b32.xlu0 %v518, 1
          %v535 = vpop.permute.xlu0 %534
          %536 = vrot.lane.b32.xlu0 %v519, 1
          %v537 = vpop.permute.xlu0 %536
          %538 = vrot.lane.b32.xlu0 %v520, 1
          %v539 = vpop.permute.xlu0 %538
          %540 = vrot.lane.b32.xlu0 %v521, 1
          %v541 = vpop.permute.xlu0 %540
          %542 = vrot.lane.b32.xlu0 %v522, 1
          %v543 = vpop.permute.xlu0 %542
          %544 = vrot.lane.b32.xlu0 %v523, 1
          %v545 = vpop.permute.xlu0 %544
          %546 = vrot.lane.b32.xlu0 %v524, 1
          %v547 = vpop.permute.xlu0 %546
          %548 = vrot.lane.b32.xlu0 %v525, 1
          %v549 = vpop.permute.xlu0 %548
          %v558 = vsub.f32 %v495, %v535
          %v559 = vsub.f32 %v498, %v537
          %v560 = vsub.f32 %v501, %v539
          %v561 = vsub.f32 %v504, %v541
          %v562 = vsub.f32 %v507, %v543
          %v563 = vsub.f32 %v510, %v545
          %v564 = vsub.f32 %v513, %v547
          %v565 = vsub.f32 %v516, %v549
          %v566 = vmax.f32 %v558, 0.0
          %v567 = vmax.f32 %v559, 0.0
          %v568 = vmax.f32 %v560, 0.0
          %v569 = vmax.f32 %v561, 0.0
          %v570 = vmax.f32 %v562, 0.0
          %v571 = vmax.f32 %v563, 0.0
          %v572 = vmax.f32 %v564, 0.0
          %v573 = vmax.f32 %v565, 0.0
          %v574 = vadd.f32 %v566, 1e-06
          %v575 = vadd.f32 %v567, 1e-06
          %v576 = vadd.f32 %v568, 1e-06
          %v577 = vadd.f32 %v569, 1e-06
          %v578 = vadd.f32 %v570, 1e-06
          %v579 = vadd.f32 %v571, 1e-06
          %v580 = vadd.f32 %v572, 1e-06
          %v581 = vadd.f32 %v573, 1e-06
          %v582 = vrsqrt.pop %v574
          %v583 = vmul.f32 %v582, %v574
          %v584 = vmul.f32 %v583, %v582
          %v585 = vmul.f32 0.5, %v584
          %v586 = vsub.f32 1.5, %v585
          %v587 = vmul.f32 %v582, %v586
          %vm588 = vweird.f32 %v574
          %vm589 = vweird.f32 %v582
          %vm590 = vmor %vm588, %vm589
          %v591 = vsel %vm590, %v582, %v587
          %v592 = vrsqrt.pop %v575
          %v593 = vmul.f32 %v592, %v575
          %v594 = vmul.f32 %v593, %v592
          %v595 = vmul.f32 0.5, %v594
          %v596 = vsub.f32 1.5, %v595
          %v597 = vmul.f32 %v592, %v596
          %vm598 = vweird.f32 %v575
          %vm599 = vweird.f32 %v592
          %vm600 = vmor %vm598, %vm599
          %v601 = vsel %vm600, %v592, %v597
          %v602 = vrsqrt.pop %v576
          %v603 = vmul.f32 %v602, %v576
          %v604 = vmul.f32 %v603, %v602
          %v605 = vmul.f32 0.5, %v604
          %v606 = vsub.f32 1.5, %v605
          %v607 = vmul.f32 %v602, %v606
          %vm608 = vweird.f32 %v576
          %vm609 = vweird.f32 %v602
          %vm610 = vmor %vm608, %vm609
          %v611 = vsel %vm610, %v602, %v607
          %v612 = vrsqrt.pop %v577
          %v613 = vmul.f32 %v612, %v577
          %v614 = vmul.f32 %v613, %v612
          %v615 = vmul.f32 0.5, %v614
          %v616 = vsub.f32 1.5, %v615
          %v617 = vmul.f32 %v612, %v616
          %vm618 = vweird.f32 %v577
          %vm619 = vweird.f32 %v612
          %vm620 = vmor %vm618, %vm619
          %v621 = vsel %vm620, %v612, %v617
          %v622 = vrsqrt.pop %v578
          %v623 = vmul.f32 %v622, %v578
          %v624 = vmul.f32 %v623, %v622
          %v625 = vmul.f32 0.5, %v624
          %v626 = vsub.f32 1.5, %v625
          %v627 = vmul.f32 %v622, %v626
          %vm628 = vweird.f32 %v578
          %vm629 = vweird.f32 %v622
          %vm630 = vmor %vm628, %vm629
          %v631 = vsel %vm630, %v622, %v627
          %v632 = vrsqrt.pop %v579
          %v633 = vmul.f32 %v632, %v579
          %v634 = vmul.f32 %v633, %v632
          %v635 = vmul.f32 0.5, %v634
          %v636 = vsub.f32 1.5, %v635
          %v637 = vmul.f32 %v632, %v636
          %vm638 = vweird.f32 %v579
          %vm639 = vweird.f32 %v632
          %vm640 = vmor %vm638, %vm639
          %v641 = vsel %vm640, %v632, %v637
          %v642 = vrsqrt.pop %v580
          %v643 = vmul.f32 %v642, %v580
          %v644 = vmul.f32 %v643, %v642
          %v645 = vmul.f32 0.5, %v644
          %v646 = vsub.f32 1.5, %v645
          %v647 = vmul.f32 %v642, %v646
          %vm648 = vweird.f32 %v580
          %vm649 = vweird.f32 %v642
          %vm650 = vmor %vm648, %vm649
          %v651 = vsel %vm650, %v642, %v647
          %v652 = vrsqrt.pop %v581
          %v653 = vmul.f32 %v652, %v581
          %v654 = vmul.f32 %v653, %v652
          %v655 = vmul.f32 0.5, %v654
          %v656 = vsub.f32 1.5, %v655
          %v657 = vmul.f32 %v652, %v656
          %vm658 = vweird.f32 %v581
          %vm659 = vweird.f32 %v652
          %vm660 = vmor %vm658, %vm659
          %v661 = vsel %vm660, %v652, %v657
          %663 = vset.pattern.permute.xlu0 0
          %664 = vperm.xlu0 %663, %v495
          %v665 = vpop.permute.xlu0 %664
          %668 = vset.pattern.permute.xlu0 0
          %669 = vperm.xlu0 %668, %v498
          %v670 = vpop.permute.xlu0 %669
          %673 = vset.pattern.permute.xlu0 0
          %674 = vperm.xlu0 %673, %v501
          %v675 = vpop.permute.xlu0 %674
          %678 = vset.pattern.permute.xlu0 0
          %679 = vperm.xlu0 %678, %v504
          %v680 = vpop.permute.xlu0 %679
          %683 = vset.pattern.permute.xlu0 0
          %684 = vperm.xlu0 %683, %v507
          %v685 = vpop.permute.xlu0 %684
          %688 = vset.pattern.permute.xlu0 0
          %689 = vperm.xlu0 %688, %v510
          %v690 = vpop.permute.xlu0 %689
          %693 = vset.pattern.permute.xlu0 0
          %694 = vperm.xlu0 %693, %v513
          %v695 = vpop.permute.xlu0 %694
          %698 = vset.pattern.permute.xlu0 0
          %699 = vperm.xlu0 %698, %v516
          %v700 = vpop.permute.xlu0 %699
          %v702 = vsub.f32 %v309, %v665
          %v703 = vsub.f32 %v310, %v665
          %v704 = vsub.f32 %v311, %v670
          %v705 = vsub.f32 %v312, %v670
          %v706 = vsub.f32 %v313, %v675
          %v707 = vsub.f32 %v314, %v675
          %v708 = vsub.f32 %v315, %v680
          %v709 = vsub.f32 %v316, %v680
          %v710 = vsub.f32 %v317, %v685
          %v711 = vsub.f32 %v318, %v685
          %v712 = vsub.f32 %v319, %v690
          %v713 = vsub.f32 %v320, %v690
          %v714 = vsub.f32 %v321, %v695
          %v715 = vsub.f32 %v322, %v695
          %v716 = vsub.f32 %v323, %v700
          %v717 = vsub.f32 %v324, %v700
          %719 = vset.pattern.permute.xlu0 1
          %720 = vperm.xlu0 %719, %v591
          %v721 = vpop.permute.xlu0 %720
          %724 = vset.pattern.permute.xlu0 1
          %725 = vperm.xlu0 %724, %v601
          %v726 = vpop.permute.xlu0 %725
          %729 = vset.pattern.permute.xlu0 1
          %730 = vperm.xlu0 %729, %v611
          %v731 = vpop.permute.xlu0 %730
          %734 = vset.pattern.permute.xlu0 1
          %735 = vperm.xlu0 %734, %v621
          %v736 = vpop.permute.xlu0 %735
          %739 = vset.pattern.permute.xlu0 1
          %740 = vperm.xlu0 %739, %v631
          %v741 = vpop.permute.xlu0 %740
          %744 = vset.pattern.permute.xlu0 1
          %745 = vperm.xlu0 %744, %v641
          %v746 = vpop.permute.xlu0 %745
          %749 = vset.pattern.permute.xlu0 1
          %750 = vperm.xlu0 %749, %v651
          %v751 = vpop.permute.xlu0 %750
          %754 = vset.pattern.permute.xlu0 1
          %755 = vperm.xlu0 %754, %v661
          %v756 = vpop.permute.xlu0 %755
          %v758 = vmul.f32 %v702, %v721
          %v759 = vmul.f32 %v703, %v721
          %v760 = vmul.f32 %v704, %v726
          %v761 = vmul.f32 %v705, %v726
          %v762 = vmul.f32 %v706, %v731
          %v763 = vmul.f32 %v707, %v731
          %v764 = vmul.f32 %v708, %v736
          %v765 = vmul.f32 %v709, %v736
          %v766 = vmul.f32 %v710, %v741
          %v767 = vmul.f32 %v711, %v741
          %v768 = vmul.f32 %v712, %v746
          %v769 = vmul.f32 %v713, %v746
          %v770 = vmul.f32 %v714, %v751
          %v771 = vmul.f32 %v715, %v751
          %v772 = vmul.f32 %v716, %v756
          %v773 = vmul.f32 %v717, %v756
          %v774 = vpack.c.bf16 %v759, %v758
          %v775 = vpack.c.bf16 %v761, %v760
          %v776 = vpack.c.bf16 %v763, %v762
          %v777 = vpack.c.bf16 %v765, %v764
          %v778 = vpack.c.bf16 %v767, %v766
          %v779 = vpack.c.bf16 %v769, %v768
          %v780 = vpack.c.bf16 %v771, %v770
          %v781 = vpack.c.bf16 %v773, %v772
          %782 = vst [vmem:[#allocation2] sm:$0xff] %v774
          %783 = vst [vmem:[#allocation2 + $0x8] sm:$0xff] %v775
          %784 = vst [vmem:[#allocation2 + $0x10] sm:$0xff] %v776
          %785 = vst [vmem:[#allocation2 + $0x18] sm:$0xff] %v777
          %786 = vst [vmem:[#allocation2 + $0x20] sm:$0xff] %v778
          %787 = vst [vmem:[#allocation2 + $0x28] sm:$0xff] %v779
          %788 = vst [vmem:[#allocation2 + $0x30] sm:$0xff] %v780
          %789 = vst [vmem:[#allocation2 + $0x38] sm:$0xff] %v781
        $region48: #{tpu_custom_call.1} parent=39 // pred_fallthru
          _
        %v790 = vld [vmem:[%s295] sm:$0xf]
        %v791 = vld [vmem:[%s295 + $0x4] sm:$0xf]
        %v792 = vld [vmem:[%s295 + $0x8] sm:$0xf]
        %v793 = vld [vmem:[%s295 + $0xc] sm:$0xf]
        %v794 = vld [vmem:[%s295 + $0x10] sm:$0xf]
        %v795 = vld [vmem:[%s295 + $0x14] sm:$0xf]
        %v796 = vld [vmem:[%s295 + $0x18] sm:$0xf]
        %v797 = vld [vmem:[%s295 + $0x1c] sm:$0xf]
        %v798 = vld [vmem:[#allocation2] sm:$0xff]
        %v799 = vld [vmem:[#allocation2 + $0x8] sm:$0xff]
        %v800 = vld [vmem:[#allocation2 + $0x10] sm:$0xff]
        %v801 = vld [vmem:[#allocation2 + $0x18] sm:$0xff]
        %v802 = vld [vmem:[#allocation2 + $0x20] sm:$0xff]
        %v803 = vld [vmem:[#allocation2 + $0x28] sm:$0xff]
        %v804 = vld [vmem:[#allocation2 + $0x30] sm:$0xff]
        %v805 = vld [vmem:[#allocation2 + $0x38] sm:$0xff]
        %s806 = smul.u32 %s27, 64
        %s807 = sshra.s32 %s806, 3
        %s808 = sand.u32 %s806, 7
        %s809 = smul.u32 %s807, 2
        %s810 = smul.addr %s809, 8
        %s811 = scalar_lea.vmem %s253, %s810 [#allocation3]
        %v812 = vld [vmem:[%s811] sm:$0xff]
        %v813 = vld [vmem:[%s811 + $0x8] sm:$0xff]
        %v814 = vld [vmem:[%s811 + $0x10] sm:$0xff]
        %v815 = vld [vmem:[%s811 + $0x18] sm:$0xff]
        %v816 = vld [vmem:[%s811 + $0x20] sm:$0xff]
        %v817 = vld [vmem:[%s811 + $0x28] sm:$0xff]
        %v818 = vld [vmem:[%s811 + $0x30] sm:$0xff]
        %v819 = vld [vmem:[%s811 + $0x38] sm:$0xff]
        %v820 = vld [vmem:[%s811 + $0x40] sm:$0xff]
        %v821 = vld [vmem:[%s811 + $0x48] sm:$0xff]
        %v822 = vld [vmem:[%s811 + $0x50] sm:$0xff]
        %v823 = vld [vmem:[%s811 + $0x58] sm:$0xff]
        %v824 = vld [vmem:[%s811 + $0x60] sm:$0xff]
        %v825 = vld [vmem:[%s811 + $0x68] sm:$0xff]
        %v826 = vld [vmem:[%s811 + $0x70] sm:$0xff]
        %v827 = vld [vmem:[%s811 + $0x78] sm:$0xff]
        %v828 = vld [vmem:[%s301] sm:$0xff]
        %v829 = vld [vmem:[%s301 + $0x8] sm:$0xff]
        %v830 = vld [vmem:[%s301 + $0x10] sm:$0xff]
        %v831 = vld [vmem:[%s301 + $0x18] sm:$0xff]
        %v832 = vld [vmem:[%s301 + $0x20] sm:$0xff]
        %v833 = vld [vmem:[%s301 + $0x28] sm:$0xff]
        %v834 = vld [vmem:[%s301 + $0x30] sm:$0xff]
        %v835 = vld [vmem:[%s301 + $0x38] sm:$0xff]
        %837 = vset.pattern.permute.xlu0 0
        %838 = vperm.xlu0 %837, %v828
        %v839 = vpop.permute.xlu0 %838
        %842 = vset.pattern.permute.xlu0 0
        %843 = vperm.xlu0 %842, %v829
        %v844 = vpop.permute.xlu0 %843
        %847 = vset.pattern.permute.xlu0 0
        %848 = vperm.xlu0 %847, %v830
        %v849 = vpop.permute.xlu0 %848
        %852 = vset.pattern.permute.xlu0 0
        %853 = vperm.xlu0 %852, %v831
        %v854 = vpop.permute.xlu0 %853
        %857 = vset.pattern.permute.xlu0 0
        %858 = vperm.xlu0 %857, %v832
        %v859 = vpop.permute.xlu0 %858
        %862 = vset.pattern.permute.xlu0 0
        %863 = vperm.xlu0 %862, %v833
        %v864 = vpop.permute.xlu0 %863
        %867 = vset.pattern.permute.xlu0 0
        %868 = vperm.xlu0 %867, %v834
        %v869 = vpop.permute.xlu0 %868
        %872 = vset.pattern.permute.xlu0 0
        %873 = vperm.xlu0 %872, %v835
        %v874 = vpop.permute.xlu0 %873
        %v884 = vunpack.c.l.b16 %v790
        %v885 = vunpack.c.l.b16 %v791
        %v886 = vunpack.c.l.b16 %v792
        %v887 = vunpack.c.l.b16 %v793
        %v888 = vunpack.c.l.b16 %v794
        %v889 = vunpack.c.l.b16 %v795
        %v890 = vunpack.c.l.b16 %v796
        %v891 = vunpack.c.l.b16 %v797
        %v892 = vpack.c.b16 %v885, %v884
        %v893 = vpack.c.b16 %v887, %v886
        %v894 = vpack.c.b16 %v889, %v888
        %v895 = vpack.c.b16 %v891, %v890
        %v904 = vunpack.c.l.b16 %v798
        %v905 = vunpack.c.h.b16 %v798
        %v906 = vunpack.c.l.b16 %v799
        %v907 = vunpack.c.h.b16 %v799
        %v908 = vunpack.c.l.b16 %v800
        %v909 = vunpack.c.h.b16 %v800
        %v910 = vunpack.c.l.b16 %v801
        %v911 = vunpack.c.h.b16 %v801
        %v912 = vunpack.c.l.b16 %v802
        %v913 = vunpack.c.h.b16 %v802
        %v914 = vunpack.c.l.b16 %v803
        %v915 = vunpack.c.h.b16 %v803
        %v916 = vunpack.c.l.b16 %v804
        %v917 = vunpack.c.h.b16 %v804
        %v918 = vunpack.c.l.b16 %v805
        %v919 = vunpack.c.h.b16 %v805
        %v920 = vpack.c.b16 %v906, %v904
        %v921 = vpack.c.b16 %v907, %v905
        %v922 = vpack.c.b16 %v910, %v908
        %v923 = vpack.c.b16 %v911, %v909
        %v924 = vpack.c.b16 %v914, %v912
        %v925 = vpack.c.b16 %v915, %v913
        %v926 = vpack.c.b16 %v918, %v916
        %v927 = vpack.c.b16 %v919, %v917
        %vm936 = vcmask 523264
        %v938 = vsel %vm936, %v892, 0
        %v941 = vsel %vm936, %v893, 0
        %v944 = vsel %vm936, %v894, 0
        %v947 = vsel %vm936, %v895, 0
        %949 = vmatpush.bf16.msra.mxu0 0
        %950 = vmatpush.bf16.msra.mxu0 0
        %951 = vmatpush.bf16.msra.mxu0 0
        %952 = vmatpush.bf16.msra.mxu0 0
        %953 = vmatpush.bf16.msra.mxu0 %v926
        %954 = vmatpush.bf16.msra.mxu0 %v924
        %955 = vmatpush.bf16.msra.mxu0 %v922
        %956 = vmatpush.bf16.msra.mxu0 %v920
        %957 = vmatmul.bf16.gmra.mxu0 %v938
        %v958 = vpop.f32.mrf.mxu0
        %v959 = vadd.f32 %v839, %v958
        %v960 = vpop.f32.mrf.mxu0
        %v961 = vadd.f32 %v844, %v960
        %962 = vmatmul.bf16.gmra.mxu0 %v941
        %v963 = vpop.f32.mrf.mxu0
        %v964 = vadd.f32 %v849, %v963
        %v965 = vpop.f32.mrf.mxu0
        %v966 = vadd.f32 %v854, %v965
        %967 = vmatmul.bf16.gmra.mxu0 %v944
        %v968 = vpop.f32.mrf.mxu0
        %v969 = vadd.f32 %v859, %v968
        %v970 = vpop.f32.mrf.mxu0
        %v971 = vadd.f32 %v864, %v970
        %972 = vmatmul.bf16.gmra.mxu0 %v947
        %v973 = vpop.f32.mrf.mxu0
        %v974 = vadd.f32 %v869, %v973
        %v975 = vpop.f32.mrf.mxu0
        %v976 = vadd.f32 %v874, %v975
        %977 = vdwg.mxu0
        %978 = vmatpush.bf16.msra.mxu0 0
        %979 = vmatpush.bf16.msra.mxu0 0
        %980 = vmatpush.bf16.msra.mxu0 0
        %981 = vmatpush.bf16.msra.mxu0 0
        %982 = vmatpush.bf16.msra.mxu0 %v927
        %983 = vmatpush.bf16.msra.mxu0 %v925
        %984 = vmatpush.bf16.msra.mxu0 %v923
        %985 = vmatpush.bf16.msra.mxu0 %v921
        %986 = vmatmul.bf16.gmra.mxu0 %v938
        %v987 = vpop.f32.mrf.mxu0
        %v988 = vadd.f32 %v839, %v987
        %v989 = vpop.f32.mrf.mxu0
        %v990 = vadd.f32 %v844, %v989
        %991 = vmatmul.bf16.gmra.mxu0 %v941
        %v992 = vpop.f32.mrf.mxu0
        %v993 = vadd.f32 %v849, %v992
        %v994 = vpop.f32.mrf.mxu0
        %v995 = vadd.f32 %v854, %v994
        %996 = vmatmul.bf16.gmra.mxu0 %v944
        %v997 = vpop.f32.mrf.mxu0
        %v998 = vadd.f32 %v859, %v997
        %v999 = vpop.f32.mrf.mxu0
        %v1000 = vadd.f32 %v864, %v999
        %1001 = vmatmul.bf16.gmra.mxu0 %v947
        %v1002 = vpop.f32.mrf.mxu0
        %v1003 = vadd.f32 %v869, %v1002
        %v1004 = vpop.f32.mrf.mxu0
        %v1005 = vadd.f32 %v874, %v1004
        %1006 = vdwg.mxu0
        %v1007 = vadd.f32 %v959, %v812
        %v1008 = vadd.f32 %v988, %v813
        %v1009 = vadd.f32 %v961, %v814
        %v1010 = vadd.f32 %v990, %v815
        %v1011 = vadd.f32 %v964, %v816
        %v1012 = vadd.f32 %v993, %v817
        %v1013 = vadd.f32 %v966, %v818
        %v1014 = vadd.f32 %v995, %v819
        %v1015 = vadd.f32 %v969, %v820
        %v1016 = vadd.f32 %v998, %v821
        %v1017 = vadd.f32 %v971, %v822
        %v1018 = vadd.f32 %v1000, %v823
        %v1019 = vadd.f32 %v974, %v824
        %v1020 = vadd.f32 %v1003, %v825
        %v1021 = vadd.f32 %v976, %v826
        %v1022 = vadd.f32 %v1005, %v827
        %1023 = vst [vmem:[%s290] sm:$0xff] %v1007
        %1024 = vst [vmem:[%s290 + $0x8] sm:$0xff] %v1008
        %1025 = vst [vmem:[%s290 + $0x10] sm:$0xff] %v1009
        %1026 = vst [vmem:[%s290 + $0x18] sm:$0xff] %v1010
        %1027 = vst [vmem:[%s290 + $0x20] sm:$0xff] %v1011
        %1028 = vst [vmem:[%s290 + $0x28] sm:$0xff] %v1012
        %1029 = vst [vmem:[%s290 + $0x30] sm:$0xff] %v1013
        %1030 = vst [vmem:[%s290 + $0x38] sm:$0xff] %v1014
        %1031 = vst [vmem:[%s290 + $0x40] sm:$0xff] %v1015
        %1032 = vst [vmem:[%s290 + $0x48] sm:$0xff] %v1016
        %1033 = vst [vmem:[%s290 + $0x50] sm:$0xff] %v1017
        %1034 = vst [vmem:[%s290 + $0x58] sm:$0xff] %v1018
        %1035 = vst [vmem:[%s290 + $0x60] sm:$0xff] %v1019
        %1036 = vst [vmem:[%s290 + $0x68] sm:$0xff] %v1020
        %1037 = vst [vmem:[%s290 + $0x70] sm:$0xff] %v1021
        %1038 = vst [vmem:[%s290 + $0x78] sm:$0xff] %v1022
        %s1039 = sand.u32 %s164, 1
        %s1040 = scalar_lea.sflag [#allocation5], %s1039
        %s1041 = sand.u32 %s164, 1
        %s1042 = smul.addr %s1041, 128
        %s1043 = scalar_lea.vmem [#allocation6], %s1042
        // Predicated region
        $region49: #{tpu_custom_call.1} parent=39 // pred_check
          %p1044 = pneg %p174
        $region50: #{tpu_custom_call.1} parent=39 // pred_check_branch
          %1046 = sbr.rel (%p1044) target = $region52
        $region51: #{tpu_custom_call.1} parent=39 // pred_region
          %s1047 = smul.u32 8, %s27
          %1049 = vsyncadd %s1040, 0
          %s1050 = smul.addr %s1047, 2
          %s1051 = smul.addr %s26, 16
          %s1052 = sadd.s32 %s1050, %s1051
          %s1053 = smul.addr %s1052, 8
          %s1054 = scalar_lea.hbm %s5, %s1053
          %s1055 = sshll.u32 %s1043, 4
          %s1056 = int_to_ptr.vmem [resolvable:$true] %s1055
          %s1057 = sshll.u32 %s1054, 4
          %s1058 = int_to_ptr.hbm [resolvable:$true] %s1057
          %1063 = dma.vmem_to_hbm [thread:$0]  %s1056, 2048, %s1058, %s1040, 256, 256, 16
        $region52: #{tpu_custom_call.1} parent=39 // pred_fallthru
          _
      $region40: #{tpu_custom_call.1} parent=5 // pred_fallthru
        _
      %p1064 = scmp.le.s32.totalorder 2, %s17
      // Predicated region
      $region53: #{tpu_custom_call.1} parent=5 // pred_check
        %p1065 = pneg %p1064
      $region54: #{tpu_custom_call.1} parent=5 // pred_check_branch
        %1067 = sbr.rel (%p1065) target = $region56
      $region55: #{tpu_custom_call.1} parent=5 // pred_region
        %s1068 = ssub.s32 %s17, 2
        // Predicated region
        $region57: #{tpu_custom_call.1} parent=55 // pred_check
          %p1069 = pneg %p180
        $region58: #{tpu_custom_call.1} parent=55 // pred_check_branch
          %1071 = sbr.rel (%p1069) target = $region60
        $region59: #{tpu_custom_call.1} parent=55 // pred_region
          %s1072 = sand.u32 %s165, 1
          %s1073 = scalar_lea.sflag [#allocation5], %s1072
          %s1074 = sand.u32 %s165, 1
          %s1075 = smul.addr %s1074, 128
          %s1076 = scalar_lea.vmem [#allocation6], %s1075
          %1078 = dma.done %s1073, 2048
        $region60: #{tpu_custom_call.1} parent=55 // pred_fallthru
          _
      $region56: #{tpu_custom_call.1} parent=5 // pred_fallthru
        _
    $region6: #{tpu_custom_call.1} parent=1 // loop_footer
      %s21 = sadd.s32 1, %s17
    $region7: #{tpu_custom_call.1} parent=1 // loop_footer_branch
      %16 = sbr.rel target = $region3
    $region8: #{tpu_custom_call.1} parent=1 // loop_exit
      _
    %1079 = vsyncpa [#allocation4], 1
    %s1080 = scalar_lea.sflag [#allocation4], 1
    %1081 = vsyncpa %s1080, 1
    %1082 = vsyncpa [#allocation5], 1
    %s1083 = scalar_lea.sflag [#allocation5], 1
    %1084 = vsyncpa %s1083, 1

</llo_original>
